<compile_context>
chip_gen: v6e
topology: v6e:2x2x1
jax: 0.10.0
libtpu: 0.0.40
codegen_flags: <defaults>
</compile_context>

<pallas_src>
import jax
import jax.numpy as jnp
from jax import lax
from jax.experimental import pallas as pl
from jax.experimental.pallas import tpu as pltpu

_EPS = 1e-12          # matches torch.nn.functional.normalize default
_ROW_CHUNK = 256      # rows processed per in-kernel reduction chunk
_MIN_GRID_STEPS = 4   # keep the parallel axis shardable across v7x's 2 TCs


def _round_up(n, m):
    return ((n + m - 1) // m) * m


def _aesthetic_kernel(x_ref, w_ref, b_ref, o_ref):
    # x_ref: (tb, D) VMEM block; w_ref: (1, D) VMEM (resident across steps);
    # b_ref: (1,) SMEM scalar; o_ref: (tb, 1) VMEM block.
    tb, d = x_ref.shape
    rc = tb if tb <= _ROW_CHUNK else _ROW_CHUNK    # wrapper guarantees tb % rc == 0
    n_chunks = tb // rc

    sqrt_d = jnp.sqrt(jnp.float32(d))
    bias = b_ref[0]
    # Hoist the sublane broadcast of the weight row out of the chunk loop
    # (JAX does not CSE broadcast_in_dim inside loops).
    w = jnp.broadcast_to(w_ref[...].astype(jnp.float32), (rc, d))

    @pl.loop(0, n_chunks)
    def _(c):
        r = pl.multiple_of(c * rc, rc)
        x = x_ref[pl.ds(r, rc), :].astype(jnp.float32)       # (rc, D)
        dot = jnp.sum(x * w, axis=-1, keepdims=True)         # (rc, 1)
        sumsq = jnp.sum(x * x, axis=-1, keepdims=True)       # (rc, 1)
        # sqrt(D) / max(||x||, eps) == sqrt(D) * rsqrt(max(sumsq, eps^2))
        scale = sqrt_d * lax.rsqrt(jnp.maximum(sumsq, jnp.float32(_EPS * _EPS)))
        o_ref[pl.ds(r, rc), :] = (dot * scale + bias).astype(o_ref.dtype)


def aesthetic_mean_prediction_linear(x, weight, bias, *, block_b=None):
    """x: (B, D); weight: (1, D) (PyTorch Linear layout); bias: (1,). Returns (B, 1)."""
    B, D = x.shape
    itemsize = jnp.dtype(x.dtype).itemsize

    # Generation-aware VMEM budget (v7x: 64 MiB physical; v5e/v6e: 128 MiB).
    try:
        vmem_cap = int(pltpu.get_tpu_info().vmem_capacity_bytes)
    except Exception:
        vmem_cap = 64 * 1024 * 1024  # conservative (v7x) fallback
    tile_budget = min(16 * 1024 * 1024, vmem_cap // 5)

    if block_b is None:
        budget_rows = max(8, tile_budget // (D * itemsize))
        # Keep at least _MIN_GRID_STEPS grid steps when B allows, so megacore
        # can shard the "parallel" batch axis (no effect on 1-TC chips).
        step_cap = _round_up(pl.cdiv(B, _MIN_GRID_STEPS), 8)
        block_b = min(budget_rows, step_cap)
    block_b = max(8, _round_up(int(block_b), 8))
    if block_b > _ROW_CHUNK:
        # Keep block_b a multiple of the in-kernel row chunk.
        block_b = (block_b // _ROW_CHUNK) * _ROW_CHUNK

    grid = (pl.cdiv(B, block_b),)

    tile_bytes = block_b * D * itemsize
    # 2x double-buffered x tile + headroom for weight/broadcast/output/scratch,
    # capped safely below the physical VMEM of the current generation.
    vmem_limit = int(min(vmem_cap * 3 // 4,
                         max(32 * 1024 * 1024, 2 * tile_bytes + 8 * 1024 * 1024)))

    out_dtype = jnp.promote_types(x.dtype, weight.dtype)  # f32 for f32 params
    w_row = weight.reshape(1, D)                           # lane-major weight row
    b_vec = bias.reshape(1).astype(jnp.float32)            # scalar bias -> SMEM

    return pl.pallas_call(
        _aesthetic_kernel,
        out_shape=jax.ShapeDtypeStruct((B, 1), out_dtype),
        grid_spec=pltpu.PrefetchScalarGridSpec(
            num_scalar_prefetch=0,
            grid=grid,
            in_specs=[
                pl.BlockSpec((block_b, D), lambda i: (i, 0)),        # x tile
                pl.BlockSpec((1, D), lambda i: (0, 0)),              # weight (resident)
                pl.BlockSpec(memory_space=pltpu.MemorySpace.SMEM),   # bias scalar
            ],
            out_specs=pl.BlockSpec((block_b, 1), lambda i: (i, 0)),
        ),
        compiler_params=pltpu.CompilerParams(
            dimension_semantics=("parallel",),
            vmem_limit_bytes=vmem_limit,
        ),
    )(x, w_row, b_vec)


def _reference(x, weight, bias):
    # Pure-JAX reference mirroring the PyTorch forward.
    d = x.shape[-1]
    norm = jnp.sqrt(jnp.sum(x * x, axis=-1, keepdims=True))
    xn = x / jnp.maximum(norm, _EPS) * jnp.sqrt(jnp.float32(d))
    return xn @ weight.T + bias


if __name__ == "__main__":
    D = 256  # feats_in (CLIP-embedding-like, kept small for the smoke test)

    key = jax.random.PRNGKey(0)
    kw, kb, k1, k2, k3 = jax.random.split(key, 5)
    # Deterministic synthetic Linear(feats_in, 1) parameters: W (1, D), b (1,)
    bound = 1.0 / (D ** 0.5)
    weight = jax.random.uniform(kw, (1, D), jnp.float32, -bound, bound)
    bias = jax.random.uniform(kb, (1,), jnp.float32, -bound, bound)

    def _check(name, x):
        out = jax.block_until_ready(aesthetic_mean_prediction_linear(x, weight, bias))
        ref = _reference(x, weight, bias)
        assert out.shape == (x.shape[0], 1), (name, out.shape)
        err = float(jnp.max(jnp.abs(out - ref)))
        assert jnp.allclose(out, ref, atol=1e-4, rtol=1e-4), (name, err)

    # Case 1: small aligned batch (single grid step, single row chunk).
    _check("aligned", jax.random.normal(k1, (8, D), dtype=jnp.float32))
    # Case 2: ragged batch (exercises the clamped partial last block, no jnp.pad).
    _check("ragged", jax.random.normal(k2, (23, D), dtype=jnp.float32))
    # Case 3: larger batch (multi-step grid, multi-chunk reduction, partial tail).
    _check("large", jax.random.normal(k3, (2304, D), dtype=jnp.float32))

    print("KERNEL_OK")
</pallas_src>

<mosaic_0001>
module attributes {stable_mosaic.version = 11 : i64} {
  func.func @_aesthetic_kernel(%arg0: i32, %arg1: memref<8x256xf32, #tpu.memory_space<vmem>>, %arg2: memref<1x256xf32, #tpu.memory_space<vmem>>, %arg3: memref<1xf32, #tpu.memory_space<smem>>, %arg4: memref<8x1xf32, #tpu.memory_space<vmem>>) attributes {dimension_semantics = [#tpu.dimension_semantics<parallel>], iteration_bounds = array<i64: 1>, scalar_prefetch = 0 : i64, scratch_operands = 0 : i64, tpu.core_type = #tpu.core_type<tc>, window_params = [{transform_indices = @transform_0, window_bounds = array<i64: 8, 256>}, {pipeline_mode = #tpu.pipeline_mode<synchronous>, transform_indices = @transform_1, window_bounds = array<i64: 1, 256>}, {transform_indices = @transform_2, window_bounds = array<i64: 1>}, {transform_indices = @transform_3, window_bounds = array<i64: 8, 1>}]} {
    %cst = arith.constant 2.560000e+02 : f32
    %0 = math.sqrt %cst : f32
    %c0 = arith.constant 0 : index
    %1 = memref.load %arg3[%c0] : memref<1xf32, #tpu.memory_space<smem>>
    %c0_0 = arith.constant 0 : index
    %c0_1 = arith.constant 0 : index
    %2 = vector.load %arg2[%c0_0, %c0_1] : memref<1x256xf32, #tpu.memory_space<vmem>>, vector<1x256xf32>
    %3 = vector.shape_cast %2 : vector<1x256xf32> to vector<1x256xf32>
    %4 = vector.broadcast %3 : vector<1x256xf32> to vector<8x256xf32>
    %c0_i32 = arith.constant 0 : i32
    %c1_i32 = arith.constant 1 : i32
    %5 = arith.muli %c0_i32, %c1_i32 : i32
    %c0_i32_2 = arith.constant 0 : i32
    %6 = arith.addi %c0_i32_2, %5 : i32
    %c8_i32 = arith.constant 8 : i32
    %7 = arith.muli %6, %c8_i32 : i32
    %8 = tpu.assume_multiple %7, 8 : i32
    %9 = arith.index_cast %8 : i32 to index
    %c0_3 = arith.constant 0 : index
    %10 = vector.load %arg1[%9, %c0_3] : memref<8x256xf32, #tpu.memory_space<vmem>>, vector<8x256xf32>
    %11 = arith.mulf %10, %4 : vector<8x256xf32>
    %cst_4 = arith.constant dense<0.000000e+00> : vector<8xf32>
    %12 = vector.multi_reduction <add>, %11, %cst_4 [1] : vector<8x256xf32> to vector<8xf32>
    %13 = vector.shape_cast %12 : vector<8xf32> to vector<8x1xf32>
    %14 = arith.mulf %10, %10 : vector<8x256xf32>
    %cst_5 = arith.constant dense<0.000000e+00> : vector<8xf32>
    %15 = vector.multi_reduction <add>, %14, %cst_5 [1] : vector<8x256xf32> to vector<8xf32>
    %16 = vector.shape_cast %15 : vector<8xf32> to vector<8x1xf32>
    %cst_6 = arith.constant 1.000000e-24 : f32
    %17 = vector.broadcast %cst_6 : f32 to vector<8x1xf32>
    %18 = arith.maximumf %16, %17 : vector<8x1xf32>
    %19 = math.rsqrt %18 : vector<8x1xf32>
    %20 = vector.broadcast %0 : f32 to vector<8x1xf32>
    %21 = arith.mulf %20, %19 : vector<8x1xf32>
    %22 = arith.mulf %13, %21 : vector<8x1xf32>
    %23 = vector.broadcast %1 : f32 to vector<8x1xf32>
    %24 = arith.addf %22, %23 : vector<8x1xf32>
    %25 = arith.index_cast %8 : i32 to index
    %c0_7 = arith.constant 0 : index
    %26 = vector.load %arg4[%25, %c0_7] : memref<8x1xf32, #tpu.memory_space<vmem>>, vector<8x1xf32>
    tpu.vector_store %arg4[%25, %c0_7], %24 {strides = array<i32>} : memref<8x1xf32, #tpu.memory_space<vmem>>, vector<8x1xf32>,
    %c1_i32_8 = arith.constant 1 : i32
    return
  }
  func.func @transform_0(%arg0: i32) -> (i32, i32) {
    %c0_i32 = arith.constant 0 : i32
    %c0_i32_0 = arith.constant 0 : i32
    return %arg0, %c0_i32 : i32, i32
  }
  func.func @transform_1(%arg0: i32) -> (i32, i32) {
    %c0_i32 = arith.constant 0 : i32
    %c0_i32_0 = arith.constant 0 : i32
    %c0_i32_1 = arith.constant 0 : i32
    return %c0_i32, %c0_i32_0 : i32, i32
  }
  func.func @transform_2(%arg0: i32) -> i32 {
    %c0_i32 = arith.constant 0 : i32
    %c0_i32_0 = arith.constant 0 : i32
    return %c0_i32 : i32
  }
  func.func @transform_3(%arg0: i32) -> (i32, i32) {
    %c0_i32 = arith.constant 0 : i32
    %c0_i32_0 = arith.constant 0 : i32
    return %arg0, %c0_i32 : i32, i32
  }
}

</mosaic_0001>

<llo_original>
// kernel: tpu_custom_call.1
$region0: #{tpu_custom_call.1}
  #allocation0 [shape = 'u32[]', space=smem, size = 0x4, offset = 0x4, fixed_abs, tag = 'smem constant byte address 0x4 - core index']
  #allocation1 [shape = 'u32[144,128]{1,0:T(1,128)}', space=vmem, size = 0x12000, scoped, tag = 'internal scratch']
  #allocation2 [shape = 'f32[1]{0:T(128)S(6)}', space=smem, size = 0x200, scoped, tag = 'scoped memory for tpu_custom_call.1']
  %s0 = inlined_call_operand.hbm [shape: f32[8,256], index: 0, kind: input, shape index: {}]
  %s1 = inlined_call_operand.vmem [shape: f32[1,256], index: 1, kind: input, shape index: {}]
  %s2 = inlined_call_operand.<no memory space> [shape: f32[1], index: 2, kind: input, shape index: {}]
  %s3 = inlined_call_operand.vmem [shape: f32[8,1], index: 3, kind: output, shape index: {}]
  %s4 = sld [smem:[#allocation0]]
  $region26: #{tpu_custom_call.1} parent=0
    _
  %s6 = ssub.s32 1, %s4
  %s7 = scalar_select 0, %s6, %s4
  %8 = sst [smem:[#allocation2]] %s2
  $region1: #{tpu_custom_call.1} parent=0
    #allocation3 [shape = 'u8[8192]{0}', space=vmem, size = 0x2000, scoped, tag = 'input window, operand 0, single buffered']
    #allocation4 [shape = 's32[1]{0}', space=sflag, size = 0x4, scoped, tag = 'scoped memory for tpu_custom_call.1']
    %9 = vsyncpa [#allocation4], 0
    // Predicated region
    $region2: #{tpu_custom_call.1} parent=1 // pred_check
      _
    $region3: #{tpu_custom_call.1} parent=1 // pred_check_branch
      %11 = sbr.rel (0) target = $region5
    $region4: #{tpu_custom_call.1} parent=1 // pred_region
      %s13 = ssub.s32 256, 256
      %14 = vsyncadd [#allocation4], %s13
      %s16 = sshll.u32 [#allocation3], 4
      %s17 = int_to_ptr.vmem [resolvable:$true] %s16
      %19 = dma.hbm_to_vmem [thread:$0]  %s0, 256, %s17, [#allocation4]
    $region5: #{tpu_custom_call.1} parent=1 // pred_fallthru
      _
    // Predicated region
    $region6: #{tpu_custom_call.1} parent=1 // pred_check
      _
    $region7: #{tpu_custom_call.1} parent=1 // pred_check_branch
      %21 = sbr.rel (0) target = $region9
    $region8: #{tpu_custom_call.1} parent=1 // pred_region
      _
    $region9: #{tpu_custom_call.1} parent=1 // pred_fallthru
      _
    // Predicated region
    $region10: #{tpu_custom_call.1} parent=1 // pred_check
      _
    $region11: #{tpu_custom_call.1} parent=1 // pred_check_branch
      %23 = sbr.rel (0) target = $region13
    $region12: #{tpu_custom_call.1} parent=1 // pred_region
      _
    $region13: #{tpu_custom_call.1} parent=1 // pred_fallthru
      _
    // Predicated region
    $region14: #{tpu_custom_call.1} parent=1 // pred_check
      _
    $region15: #{tpu_custom_call.1} parent=1 // pred_check_branch
      %25 = sbr.rel (0) target = $region17
    $region16: #{tpu_custom_call.1} parent=1 // pred_region
      %26 = dma.done [#allocation4], 256
    $region17: #{tpu_custom_call.1} parent=1 // pred_fallthru
      _
    %s27 = sld [smem:[#allocation2]]
    %v28 = vld [vmem:[%s1] sm:$0x3]
    %v30 = vlaneseq
    %v31 = vshrl.u32 %v30, 7
    %v32 = vsub.s32 0, %v31
    %v33 = vrot.slane %v28, %v32
    %v34 = vlaneseq
    %v35 = vshrl.u32 %v34, 7
    %v36 = vsub.s32 1, %v35
    %v37 = vrot.slane %v28, %v36
    %s40 = smul.u32 0, 2
    %s41 = smul.addr %s40, 8
    %s42 = scalar_lea.vmem [#allocation3], %s41
    %v43 = vld [vmem:[%s42] sm:$0xff]
    %v44 = vld [vmem:[%s42 + $0x8] sm:$0xff]
    %v45 = vmul.f32 %v43, %v33
    %v46 = vmul.f32 %v44, %v37
    %v47 = vadd.f32 %v45, %v46
    %48 = vadd.xlane.f32.xlu0 %v47
    %v49 = vpop.xlane.xlu0 %48
    %v50 = vmul.f32 %v43, %v43
    %v51 = vmul.f32 %v44, %v44
    %v52 = vadd.f32 %v50, %v51
    %53 = vadd.xlane.f32.xlu0 %v52
    %v54 = vpop.xlane.xlu0 %53
    %v55 = vmax.f32 %v54, 1e-24
    %v56 = vrsqrt.pop %v55
    %v57 = vmul.f32 %v56, 16.0
    %v58 = vmul.f32 %v49, %v57
    %v59 = vstv %s27
    %v60 = vadd.f32 %v58, %v59
    %vm61 = vcmask 7168
    %62 = vst.msk [vmem:[%s3] sm:$0xff] %vm61, %v60
    // Predicated region
    $region18: #{tpu_custom_call.1} parent=1 // pred_check
      _
    $region19: #{tpu_custom_call.1} parent=1 // pred_check_branch
      %64 = sbr.rel (0) target = $region21
    $region20: #{tpu_custom_call.1} parent=1 // pred_region
      _
    $region21: #{tpu_custom_call.1} parent=1 // pred_fallthru
      _
    // Predicated region
    $region22: #{tpu_custom_call.1} parent=1 // pred_check
      _
    $region23: #{tpu_custom_call.1} parent=1 // pred_check_branch
      %66 = sbr.rel (0) target = $region25
    $region24: #{tpu_custom_call.1} parent=1 // pred_region
      _
    $region25: #{tpu_custom_call.1} parent=1 // pred_fallthru
      _
    %67 = vsyncpa [#allocation4], 1

</llo_original>
